<compile_context>
chip_gen: v7x
topology: tpu7x:2x2x1
jax: 0.10.0
libtpu: 0.0.40
codegen_flags: <defaults>
</compile_context>

<pallas_src>
import jax
import jax.numpy as jnp
from jax import lax
from jax.experimental import pallas as pl
from jax.experimental.pallas import tpu as pltpu


LANE = 128
SUBLANE = 8


def _round_up(x, m):
    return (x + m - 1) // m * m


def swem_kernel(ids_ref, emb_ref, w1_ref, b1_ref, w2_ref, b2_ref, out_ref):
    # ids_ref : (TB, S)   int32               (one batch tile)
    # emb_ref : (Vp, Dp)  param dtype         (zero-padded embedding table)
    # w1_ref  : (Dp, Hp)  param dtype         (fc1.weight^T, zero-padded)
    # b1_ref  : (1, Hp)   float32
    # w2_ref  : (Hp, Op)  param dtype         (fc2.weight^T, zero-padded)
    # b2_ref  : (1, Op)   float32
    # out_ref : (TB, Op)  float32
    TB, S = ids_ref.shape
    Vp = emb_ref.shape[0]

    # Fused embedding gather + mean:
    #   counts[b, v] = #{s : ids[b, s] == v} / S  ;  mean_embed = counts @ E
    ids = ids_ref[...]                                             # (TB, S)
    vocab_iota = lax.broadcasted_iota(jnp.int32, (TB, S, Vp), 2)   # lane iota
    onehot = (ids[:, :, None] == vocab_iota).astype(jnp.float32)   # (TB, S, Vp)
    counts = jnp.sum(onehot, axis=1) * (1.0 / S)                   # (TB, Vp)

    mean_embed = jnp.dot(counts.astype(emb_ref.dtype), emb_ref[...],
                         preferred_element_type=jnp.float32)       # (TB, Dp)

    # fc1 + ReLU (f32 accumulation & elementwise math).
    h = jnp.dot(mean_embed.astype(w1_ref.dtype), w1_ref[...],
                preferred_element_type=jnp.float32) + b1_ref[...]
    h = jnp.maximum(h, 0.0)

    # fc2
    out = jnp.dot(h.astype(w2_ref.dtype), w2_ref[...],
                  preferred_element_type=jnp.float32) + b2_ref[...]
    out_ref[...] = out.astype(out_ref.dtype)


def prepare_swem_params(emb_table, w1, b1, w2, b2, *, param_dtype=jnp.float32):
    """One-time parameter prep: transpose to (in, out) and zero-pad to lane width.

    Call once at model-load time; swem_forward only consumes the result, so no
    transposes / reshapes / casts sit in the per-call hot path. Use
    param_dtype=jnp.bfloat16 on v6e/v7x for bf16 MXU operands.
    """
    V, D = emb_table.shape
    H, O = w1.shape[0], w2.shape[0]
    Vp = _round_up(V, LANE)
    Dp = _round_up(D, LANE)
    Hp = _round_up(H, LANE)
    Op = _round_up(O, LANE)

    emb_p = jnp.zeros((Vp, Dp), param_dtype).at[:V, :D].set(
        emb_table.astype(param_dtype))
    w1t_p = jnp.zeros((Dp, Hp), param_dtype).at[:D, :H].set(
        w1.T.astype(param_dtype))
    w2t_p = jnp.zeros((Hp, Op), param_dtype).at[:H, :O].set(
        w2.T.astype(param_dtype))
    b1_p = jnp.zeros((1, Hp), jnp.float32).at[0, :H].set(b1.astype(jnp.float32))
    b2_p = jnp.zeros((1, Op), jnp.float32).at[0, :O].set(b2.astype(jnp.float32))
    return dict(emb=emb_p, w1t=w1t_p, b1=b1_p, w2t=w2t_p, b2=b2_p,
                vocab_size=V, num_outputs=O)


def swem_forward(ids, params, *, batch_tile=8):
    """ids: (B, S) integer token ids. Returns (B, num_outputs) float32."""
    B, S = ids.shape
    V, O = params["vocab_size"], params["num_outputs"]
    emb_p, w1t_p = params["emb"], params["w1t"]
    b1_p, w2t_p, b2_p = params["b1"], params["w2t"], params["b2"]
    Vp, Dp = emb_p.shape
    Hp, Op = w2t_p.shape

    TB = batch_tile
    Bp = _round_up(B, TB)
    # Clamp ids (VMEM gathers have no runtime OOB check) and pad batch to TB.
    ids_p = jnp.zeros((Bp, S), jnp.int32).at[:B].set(
        jnp.clip(ids.astype(jnp.int32), 0, V - 1))

    out_p = pl.pallas_call(
        swem_kernel,
        out_shape=jax.ShapeDtypeStruct((Bp, Op), jnp.float32),
        grid=(Bp // TB,),
        in_specs=[
            pl.BlockSpec((TB, S), lambda i: (i, 0)),      # token ids (per tile)
            pl.BlockSpec((Vp, Dp), lambda i: (0, 0)),     # embedding table
            pl.BlockSpec((Dp, Hp), lambda i: (0, 0)),     # fc1.weight^T
            pl.BlockSpec((1, Hp), lambda i: (0, 0)),      # fc1.bias
            pl.BlockSpec((Hp, Op), lambda i: (0, 0)),     # fc2.weight^T
            pl.BlockSpec((1, Op), lambda i: (0, 0)),      # fc2.bias
        ],
        out_specs=pl.BlockSpec((TB, Op), lambda i: (i, 0)),
        compiler_params=pltpu.CompilerParams(
            dimension_semantics=("parallel",)),           # megacore split (v7x)
    )(ids_p, emb_p, w1t_p, b1_p, w2t_p, b2_p)

    return out_p[:B, :O]


def swem_reference(ids, emb_table, w1, b1, w2, b2):
    embed = emb_table[ids]                       # (B, S, D)
    m = jnp.mean(embed, axis=1)                  # (B, D)
    h = jnp.maximum(m @ w1.T + b1, 0.0)          # (B, H)
    return h @ w2.T + b2                         # (B, O)


if __name__ == "__main__":
    # Small, deterministic configuration consistent with the module.
    VOCAB = 50
    EMB_DIM = 32
    HIDDEN = 32
    NUM_OUT = 4
    BATCH = 2
    SEQ = 8

    key = jax.random.PRNGKey(0)
    k_ids, k_emb, k_w1, k_b1, k_w2, k_b2 = jax.random.split(key, 6)

    ids = jax.random.randint(k_ids, (BATCH, SEQ), 0, VOCAB, dtype=jnp.int32)
    emb_table = jax.random.normal(k_emb, (VOCAB, EMB_DIM), dtype=jnp.float32)
    w1 = jax.random.normal(k_w1, (HIDDEN, EMB_DIM), dtype=jnp.float32) * 0.1
    b1 = jax.random.normal(k_b1, (HIDDEN,), dtype=jnp.float32) * 0.1
    w2 = jax.random.normal(k_w2, (NUM_OUT, HIDDEN), dtype=jnp.float32) * 0.1
    b2 = jax.random.normal(k_b2, (NUM_OUT,), dtype=jnp.float32) * 0.1

    # One-time prep (transpose + pad + optional bf16 cast) outside the hot path.
    params = prepare_swem_params(emb_table, w1, b1, w2, b2)

    out = swem_forward(ids, params)
    out = jax.block_until_ready(out)

    ref = swem_reference(ids, emb_table, w1, b1, w2, b2)
    assert out.shape == (BATCH, NUM_OUT)
    assert jnp.allclose(out, ref, atol=1e-4, rtol=1e-4), (out, ref)

    print("KERNEL_OK")
</pallas_src>

<mosaic_0001>
module attributes {stable_mosaic.version = 11 : i64} {
  func.func @swem_kernel(%arg0: i32, %arg1: memref<8x8xi32, #tpu.memory_space<vmem>>, %arg2: memref<128x128xf32, #tpu.memory_space<vmem>>, %arg3: memref<128x128xf32, #tpu.memory_space<vmem>>, %arg4: memref<1x128xf32, #tpu.memory_space<vmem>>, %arg5: memref<128x128xf32, #tpu.memory_space<vmem>>, %arg6: memref<1x128xf32, #tpu.memory_space<vmem>>, %arg7: memref<8x128xf32, #tpu.memory_space<vmem>>) attributes {dimension_semantics = [#tpu.dimension_semantics<parallel>], iteration_bounds = array<i64: 1>, scalar_prefetch = 0 : i64, scratch_operands = 0 : i64, tpu.core_type = #tpu.core_type<tc>, window_params = [{transform_indices = @transform_0, window_bounds = array<i64: 8, 8>}, {pipeline_mode = #tpu.pipeline_mode<synchronous>, transform_indices = @transform_1, window_bounds = array<i64: 128, 128>}, {pipeline_mode = #tpu.pipeline_mode<synchronous>, transform_indices = @transform_2, window_bounds = array<i64: 128, 128>}, {pipeline_mode = #tpu.pipeline_mode<synchronous>, transform_indices = @transform_3, window_bounds = array<i64: 1, 128>}, {pipeline_mode = #tpu.pipeline_mode<synchronous>, transform_indices = @transform_4, window_bounds = array<i64: 128, 128>}, {pipeline_mode = #tpu.pipeline_mode<synchronous>, transform_indices = @transform_5, window_bounds = array<i64: 1, 128>}, {transform_indices = @transform_6, window_bounds = array<i64: 8, 128>}]} {
    %c0 = arith.constant 0 : index
    %c0_0 = arith.constant 0 : index
    %0 = vector.load %arg1[%c0, %c0_0] : memref<8x8xi32, #tpu.memory_space<vmem>>, vector<8x8xi32>
    %1 = tpu.iota {dimensions = array<i32: 2>} : vector<8x8x128xi32>
    %2 = vector.shape_cast %0 : vector<8x8xi32> to vector<8x8x1xi32>
    %3 = vector.broadcast %2 : vector<8x8x1xi32> to vector<8x8x128xi32>
    %4 = arith.cmpi eq, %3, %1 : vector<8x8x128xi32>
    %5 = arith.extui %4 : vector<8x8x128xi1> to vector<8x8x128xi32>
    %6 = arith.sitofp %5 : vector<8x8x128xi32> to vector<8x8x128xf32>
    %cst = arith.constant dense<0.000000e+00> : vector<8x128xf32>
    %7 = vector.multi_reduction <add>, %6, %cst [1] : vector<8x8x128xf32> to vector<8x128xf32>
    %cst_1 = arith.constant 1.250000e-01 : f32
    %8 = vector.broadcast %cst_1 : f32 to vector<8x128xf32>
    %9 = arith.mulf %7, %8 : vector<8x128xf32>
    %c0_2 = arith.constant 0 : index
    %c0_3 = arith.constant 0 : index
    %10 = vector.load %arg2[%c0_2, %c0_3] : memref<128x128xf32, #tpu.memory_space<vmem>>, vector<128x128xf32>
    %cst_4 = arith.constant dense<0.000000e+00> : vector<8x128xf32>
    %11 = tpu.matmul %9, %10, %cst_4 {dimension_numbers = #tpu.dot_dimension_numbers<[1], [0], [0], [1], [0, 0, 1, 1], [], []>} : vector<8x128xf32>, vector<128x128xf32>, vector<8x128xf32> -> vector<8x128xf32>
    %c0_5 = arith.constant 0 : index
    %c0_6 = arith.constant 0 : index
    %12 = vector.load %arg3[%c0_5, %c0_6] : memref<128x128xf32, #tpu.memory_space<vmem>>, vector<128x128xf32>
    %cst_7 = arith.constant dense<0.000000e+00> : vector<8x128xf32>
    %13 = tpu.matmul %11, %12, %cst_7 {dimension_numbers = #tpu.dot_dimension_numbers<[1], [0], [0], [1], [0, 0, 1, 1], [], []>} : vector<8x128xf32>, vector<128x128xf32>, vector<8x128xf32> -> vector<8x128xf32>
    %c0_8 = arith.constant 0 : index
    %c0_9 = arith.constant 0 : index
    %14 = vector.load %arg4[%c0_8, %c0_9] : memref<1x128xf32, #tpu.memory_space<vmem>>, vector<1x128xf32>
    %15 = vector.broadcast %14 : vector<1x128xf32> to vector<8x128xf32>
    %16 = arith.addf %13, %15 : vector<8x128xf32>
    %cst_10 = arith.constant 0.000000e+00 : f32
    %17 = vector.broadcast %cst_10 : f32 to vector<8x128xf32>
    %18 = arith.maximumf %16, %17 : vector<8x128xf32>
    %c0_11 = arith.constant 0 : index
    %c0_12 = arith.constant 0 : index
    %19 = vector.load %arg5[%c0_11, %c0_12] : memref<128x128xf32, #tpu.memory_space<vmem>>, vector<128x128xf32>
    %cst_13 = arith.constant dense<0.000000e+00> : vector<8x128xf32>
    %20 = tpu.matmul %18, %19, %cst_13 {dimension_numbers = #tpu.dot_dimension_numbers<[1], [0], [0], [1], [0, 0, 1, 1], [], []>} : vector<8x128xf32>, vector<128x128xf32>, vector<8x128xf32> -> vector<8x128xf32>
    %c0_14 = arith.constant 0 : index
    %c0_15 = arith.constant 0 : index
    %21 = vector.load %arg6[%c0_14, %c0_15] : memref<1x128xf32, #tpu.memory_space<vmem>>, vector<1x128xf32>
    %22 = vector.broadcast %21 : vector<1x128xf32> to vector<8x128xf32>
    %23 = arith.addf %20, %22 : vector<8x128xf32>
    %c0_16 = arith.constant 0 : index
    %c0_17 = arith.constant 0 : index
    %24 = vector.load %arg7[%c0_16, %c0_17] : memref<8x128xf32, #tpu.memory_space<vmem>>, vector<8x128xf32>
    tpu.vector_store %arg7[%c0_16, %c0_17], %23 {strides = array<i32>} : memref<8x128xf32, #tpu.memory_space<vmem>>, vector<8x128xf32>,
    return
  }
  func.func @transform_0(%arg0: i32) -> (i32, i32) {
    %c0_i32 = arith.constant 0 : i32
    %c0_i32_0 = arith.constant 0 : i32
    return %arg0, %c0_i32 : i32, i32
  }
  func.func @transform_1(%arg0: i32) -> (i32, i32) {
    %c0_i32 = arith.constant 0 : i32
    %c0_i32_0 = arith.constant 0 : i32
    %c0_i32_1 = arith.constant 0 : i32
    return %c0_i32, %c0_i32_0 : i32, i32
  }
  func.func @transform_2(%arg0: i32) -> (i32, i32) {
    %c0_i32 = arith.constant 0 : i32
    %c0_i32_0 = arith.constant 0 : i32
    %c0_i32_1 = arith.constant 0 : i32
    return %c0_i32, %c0_i32_0 : i32, i32
  }
  func.func @transform_3(%arg0: i32) -> (i32, i32) {
    %c0_i32 = arith.constant 0 : i32
    %c0_i32_0 = arith.constant 0 : i32
    %c0_i32_1 = arith.constant 0 : i32
    return %c0_i32, %c0_i32_0 : i32, i32
  }
  func.func @transform_4(%arg0: i32) -> (i32, i32) {
    %c0_i32 = arith.constant 0 : i32
    %c0_i32_0 = arith.constant 0 : i32
    %c0_i32_1 = arith.constant 0 : i32
    return %c0_i32, %c0_i32_0 : i32, i32
  }
  func.func @transform_5(%arg0: i32) -> (i32, i32) {
    %c0_i32 = arith.constant 0 : i32
    %c0_i32_0 = arith.constant 0 : i32
    %c0_i32_1 = arith.constant 0 : i32
    return %c0_i32, %c0_i32_0 : i32, i32
  }
  func.func @transform_6(%arg0: i32) -> (i32, i32) {
    %c0_i32 = arith.constant 0 : i32
    %c0_i32_0 = arith.constant 0 : i32
    return %arg0, %c0_i32 : i32, i32
  }
}

</mosaic_0001>

<llo_original>
// kernel: tpu_custom_call.1
$region0: #{tpu_custom_call.1}
  #allocation0 [shape = 'u32[]', space=smem, size = 0x4, offset = 0x4, fixed_abs, tag = 'smem constant byte address 0x4 - core index']
  #allocation1 [shape = 'u32[144,128]{1,0:T(1,128)}', space=vmem, size = 0x12000, scoped, tag = 'internal scratch']
  %s0 = inlined_call_operand.hbm [shape: s32[8,8], index: 0, kind: input, shape index: {}]
  %s1 = inlined_call_operand.hbm [shape: f32[128,128], index: 1, kind: input, shape index: {}]
  %s2 = inlined_call_operand.hbm [shape: f32[128,128], index: 2, kind: input, shape index: {}]
  %s3 = inlined_call_operand.vmem [shape: f32[1,128], index: 3, kind: input, shape index: {}]
  %s4 = inlined_call_operand.hbm [shape: f32[128,128], index: 4, kind: input, shape index: {}]
  %s5 = inlined_call_operand.vmem [shape: f32[1,128], index: 5, kind: input, shape index: {}]
  %s6 = inlined_call_operand.hbm [shape: f32[8,128], index: 6, kind: output, shape index: {}]
  %s7 = sld [smem:[#allocation0]]
  $region50: #{tpu_custom_call.1} parent=0
    _
  %s9 = ssub.s32 1, %s7
  %s10 = scalar_select 0, %s9, %s7
  $region1: #{tpu_custom_call.1} parent=0
    #allocation2 [shape = 'u8[4096]{0}', space=vmem, size = 0x1000, scoped, tag = 'input window, operand 0, single buffered']
    #allocation3 [shape = 's32[1]{0}', space=sflag, size = 0x4, scoped, tag = 'scoped memory for tpu_custom_call.1']
    #allocation4 [shape = 's32[1]{0}', space=sflag, size = 0x4, scoped, tag = 'scoped memory for tpu_custom_call.1']
    #allocation5 [shape = 'u8[65536]{0}', space=vmem, size = 0x10000, scoped, tag = 'input window, operand 1, single buffered']
    #allocation6 [shape = 's32[1]{0}', space=sflag, size = 0x4, scoped, tag = 'scoped memory for tpu_custom_call.1']
    #allocation7 [shape = 'u8[65536]{0}', space=vmem, size = 0x10000, scoped, tag = 'input window, operand 2, single buffered']
    #allocation8 [shape = 'u8[65536]{0}', space=vmem, size = 0x10000, scoped, tag = 'input window, operand 4, single buffered']
    #allocation9 [shape = 's32[1]{0}', space=sflag, size = 0x4, scoped, tag = 'scoped memory for tpu_custom_call.1']
    #allocation10 [shape = 'u8[4096]{0}', space=vmem, size = 0x1000, scoped, tag = 'output window, operand 0, single buffered']
    %11 = vsyncpa [#allocation3], 0
    %12 = vsyncpa [#allocation6], 0
    %13 = vsyncpa [#allocation9], 0
    %14 = vsyncpa [#allocation4], 0
    // Predicated region
    $region2: #{tpu_custom_call.1} parent=1 // pred_check
      _
    $region3: #{tpu_custom_call.1} parent=1 // pred_check_branch
      %16 = sbr.rel (0) target = $region5
    $region4: #{tpu_custom_call.1} parent=1 // pred_region
      %s18 = ssub.s32 128, 128
      %19 = vsyncadd [#allocation3], %s18
      %s21 = sshll.u32 [#allocation2], 4
      %s22 = int_to_ptr.vmem [resolvable:$true] %s21
      %24 = dma.hbm_to_vmem [thread:$0]  %s0, 128, %s22, [#allocation3]
    $region5: #{tpu_custom_call.1} parent=1 // pred_fallthru
      _
    // Predicated region
    $region6: #{tpu_custom_call.1} parent=1 // pred_check
      _
    $region7: #{tpu_custom_call.1} parent=1 // pred_check_branch
      %26 = sbr.rel (0) target = $region9
    $region8: #{tpu_custom_call.1} parent=1 // pred_region
      %s28 = ssub.s32 2048, 2048
      %29 = vsyncadd [#allocation6], %s28
      %s30 = sshll.u32 [#allocation5], 4
      %s31 = int_to_ptr.vmem [resolvable:$true] %s30
      %36 = dma.hbm_to_vmem [thread:$0]  %s1, 2048, %s31, [#allocation6], 128, 128, 8
    $region9: #{tpu_custom_call.1} parent=1 // pred_fallthru
      _
    // Predicated region
    $region10: #{tpu_custom_call.1} parent=1 // pred_check
      _
    $region11: #{tpu_custom_call.1} parent=1 // pred_check_branch
      %38 = sbr.rel (0) target = $region13
    $region12: #{tpu_custom_call.1} parent=1 // pred_region
      %s40 = ssub.s32 2048, 2048
      %41 = vsyncadd [#allocation6], %s40
      %s42 = sshll.u32 [#allocation7], 4
      %s43 = int_to_ptr.vmem [resolvable:$true] %s42
      %48 = dma.hbm_to_vmem [thread:$0]  %s2, 2048, %s43, [#allocation6], 128, 128, 8
    $region13: #{tpu_custom_call.1} parent=1 // pred_fallthru
      _
    // Predicated region
    $region14: #{tpu_custom_call.1} parent=1 // pred_check
      _
    $region15: #{tpu_custom_call.1} parent=1 // pred_check_branch
      %50 = sbr.rel (0) target = $region17
    $region16: #{tpu_custom_call.1} parent=1 // pred_region
      _
    $region17: #{tpu_custom_call.1} parent=1 // pred_fallthru
      _
    // Predicated region
    $region18: #{tpu_custom_call.1} parent=1 // pred_check
      _
    $region19: #{tpu_custom_call.1} parent=1 // pred_check_branch
      %52 = sbr.rel (0) target = $region21
    $region20: #{tpu_custom_call.1} parent=1 // pred_region
      %s54 = ssub.s32 2048, 2048
      %55 = vsyncadd [#allocation9], %s54
      %s56 = sshll.u32 [#allocation8], 4
      %s57 = int_to_ptr.vmem [resolvable:$true] %s56
      %62 = dma.hbm_to_vmem [thread:$0]  %s4, 2048, %s57, [#allocation9], 128, 128, 8
    $region21: #{tpu_custom_call.1} parent=1 // pred_fallthru
      _
    // Predicated region
    $region22: #{tpu_custom_call.1} parent=1 // pred_check
      _
    $region23: #{tpu_custom_call.1} parent=1 // pred_check_branch
      %64 = sbr.rel (0) target = $region25
    $region24: #{tpu_custom_call.1} parent=1 // pred_region
      _
    $region25: #{tpu_custom_call.1} parent=1 // pred_fallthru
      _
    // Predicated region
    $region26: #{tpu_custom_call.1} parent=1 // pred_check
      _
    $region27: #{tpu_custom_call.1} parent=1 // pred_check_branch
      %66 = sbr.rel (0) target = $region29
    $region28: #{tpu_custom_call.1} parent=1 // pred_region
      %67 = dma.done [#allocation3], 128
    $region29: #{tpu_custom_call.1} parent=1 // pred_fallthru
      _
    // Predicated region
    $region30: #{tpu_custom_call.1} parent=1 // pred_check
      _
    $region31: #{tpu_custom_call.1} parent=1 // pred_check_branch
      %69 = sbr.rel (0) target = $region33
    $region32: #{tpu_custom_call.1} parent=1 // pred_region
      %70 = dma.done [#allocation6], 2048
    $region33: #{tpu_custom_call.1} parent=1 // pred_fallthru
      _
    // Predicated region
    $region34: #{tpu_custom_call.1} parent=1 // pred_check
      _
    $region35: #{tpu_custom_call.1} parent=1 // pred_check_branch
      %72 = sbr.rel (0) target = $region37
    $region36: #{tpu_custom_call.1} parent=1 // pred_region
      %73 = dma.done [#allocation6], 2048
    $region37: #{tpu_custom_call.1} parent=1 // pred_fallthru
      _
    // Predicated region
    $region38: #{tpu_custom_call.1} parent=1 // pred_check
      _
    $region39: #{tpu_custom_call.1} parent=1 // pred_check_branch
      %75 = sbr.rel (0) target = $region41
    $region40: #{tpu_custom_call.1} parent=1 // pred_region
      %76 = dma.done [#allocation9], 2048
    $region41: #{tpu_custom_call.1} parent=1 // pred_fallthru
      _
    %v77 = vld [vmem:[#allocation2] sm:$0xff]
    %v78 = vlaneseq
    %v79 = vand.u32 %v78, 127
    %v80 = vlaneseq
    %v81 = vshrl.u32 %v80, 7
    %v82 = vsub.s32 0, %v81
    %v83 = vrot.slane %v77, %v82
    %85 = vbcast.lane.b32.xlu0 %v83, 256
    %v86 = vpop.permute.xlu0 %85
    %v87 = vlaneseq
    %v88 = vshrl.u32 %v87, 7
    %v89 = vsub.s32 1, %v88
    %v90 = vrot.slane %v77, %v89
    %92 = vbcast.lane.b32.xlu0 %v90, 256
    %v93 = vpop.permute.xlu0 %92
    %v94 = vlaneseq
    %v95 = vshrl.u32 %v94, 7
    %v96 = vsub.s32 2, %v95
    %v97 = vrot.slane %v77, %v96
    %99 = vbcast.lane.b32.xlu0 %v97, 256
    %v100 = vpop.permute.xlu0 %99
    %v101 = vlaneseq
    %v102 = vshrl.u32 %v101, 7
    %v103 = vsub.s32 3, %v102
    %v104 = vrot.slane %v77, %v103
    %106 = vbcast.lane.b32.xlu0 %v104, 256
    %v107 = vpop.permute.xlu0 %106
    %v108 = vlaneseq
    %v109 = vshrl.u32 %v108, 7
    %v110 = vsub.s32 4, %v109
    %v111 = vrot.slane %v77, %v110
    %113 = vbcast.lane.b32.xlu0 %v111, 256
    %v114 = vpop.permute.xlu0 %113
    %v115 = vlaneseq
    %v116 = vshrl.u32 %v115, 7
    %v117 = vsub.s32 5, %v116
    %v118 = vrot.slane %v77, %v117
    %120 = vbcast.lane.b32.xlu0 %v118, 256
    %v121 = vpop.permute.xlu0 %120
    %v122 = vlaneseq
    %v123 = vshrl.u32 %v122, 7
    %v124 = vsub.s32 6, %v123
    %v125 = vrot.slane %v77, %v124
    %127 = vbcast.lane.b32.xlu0 %v125, 256
    %v128 = vpop.permute.xlu0 %127
    %v129 = vlaneseq
    %v130 = vshrl.u32 %v129, 7
    %v131 = vsub.s32 7, %v130
    %v132 = vrot.slane %v77, %v131
    %134 = vbcast.lane.b32.xlu0 %v132, 256
    %v135 = vpop.permute.xlu0 %134
    %vm136 = vcmp.eq.s32.totalorder %v86, %v79
    %vm137 = vcmp.eq.s32.totalorder %v93, %v79
    %vm138 = vcmp.eq.s32.totalorder %v100, %v79
    %vm139 = vcmp.eq.s32.totalorder %v107, %v79
    %vm140 = vcmp.eq.s32.totalorder %v114, %v79
    %vm141 = vcmp.eq.s32.totalorder %v121, %v79
    %vm142 = vcmp.eq.s32.totalorder %v128, %v79
    %vm143 = vcmp.eq.s32.totalorder %v135, %v79
    %v144 = vsel %vm136, 1, 0
    %v145 = vsel %vm137, 1, 0
    %v146 = vsel %vm138, 1, 0
    %v147 = vsel %vm139, 1, 0
    %v148 = vsel %vm140, 1, 0
    %v149 = vsel %vm141, 1, 0
    %v150 = vsel %vm142, 1, 0
    %v151 = vsel %vm143, 1, 0
    %v152 = vcvt.s32.f32 %v144
    %v153 = vcvt.s32.f32 %v145
    %v154 = vcvt.s32.f32 %v146
    %v155 = vcvt.s32.f32 %v147
    %v156 = vcvt.s32.f32 %v148
    %v157 = vcvt.s32.f32 %v149
    %v158 = vcvt.s32.f32 %v150
    %v159 = vcvt.s32.f32 %v151
    %v160 = vrot.slane %v152, 4
    %v161 = vadd.f32 %v152, %v160
    %v162 = vrot.slane %v161, 2
    %v163 = vadd.f32 %v161, %v162
    %v164 = vrot.slane %v163, 1
    %v165 = vadd.f32 %v163, %v164
    %v166 = vrot.slane %v153, 4
    %v167 = vadd.f32 %v153, %v166
    %v168 = vrot.slane %v167, 2
    %v169 = vadd.f32 %v167, %v168
    %v170 = vrot.slane %v169, 1
    %v171 = vadd.f32 %v169, %v170
    %v172 = vrot.slane %v154, 4
    %v173 = vadd.f32 %v154, %v172
    %v174 = vrot.slane %v173, 2
    %v175 = vadd.f32 %v173, %v174
    %v176 = vrot.slane %v175, 1
    %v177 = vadd.f32 %v175, %v176
    %v178 = vrot.slane %v155, 4
    %v179 = vadd.f32 %v155, %v178
    %v180 = vrot.slane %v179, 2
    %v181 = vadd.f32 %v179, %v180
    %v182 = vrot.slane %v181, 1
    %v183 = vadd.f32 %v181, %v182
    %v184 = vrot.slane %v156, 4
    %v185 = vadd.f32 %v156, %v184
    %v186 = vrot.slane %v185, 2
    %v187 = vadd.f32 %v185, %v186
    %v188 = vrot.slane %v187, 1
    %v189 = vadd.f32 %v187, %v188
    %v190 = vrot.slane %v157, 4
    %v191 = vadd.f32 %v157, %v190
    %v192 = vrot.slane %v191, 2
    %v193 = vadd.f32 %v191, %v192
    %v194 = vrot.slane %v193, 1
    %v195 = vadd.f32 %v193, %v194
    %v196 = vrot.slane %v158, 4
    %v197 = vadd.f32 %v158, %v196
    %v198 = vrot.slane %v197, 2
    %v199 = vadd.f32 %v197, %v198
    %v200 = vrot.slane %v199, 1
    %v201 = vadd.f32 %v199, %v200
    %v202 = vrot.slane %v159, 4
    %v203 = vadd.f32 %v159, %v202
    %v204 = vrot.slane %v203, 2
    %v205 = vadd.f32 %v203, %v204
    %v206 = vrot.slane %v205, 1
    %v207 = vadd.f32 %v205, %v206
    %v208 = vmul.f32 %v165, 0.125
    %v209 = vmul.f32 %v171, 0.125
    %v210 = vmul.f32 %v177, 0.125
    %v211 = vmul.f32 %v183, 0.125
    %v212 = vmul.f32 %v189, 0.125
    %v213 = vmul.f32 %v195, 0.125
    %v214 = vmul.f32 %v201, 0.125
    %v215 = vmul.f32 %v207, 0.125
    %v216 = vld [vmem:[#allocation5] sm:$0xff]
    %v217 = vld [vmem:[#allocation5 + $0x8] sm:$0xff]
    %v218 = vld [vmem:[#allocation5 + $0x10] sm:$0xff]
    %v219 = vld [vmem:[#allocation5 + $0x18] sm:$0xff]
    %v220 = vld [vmem:[#allocation5 + $0x20] sm:$0xff]
    %v221 = vld [vmem:[#allocation5 + $0x28] sm:$0xff]
    %v222 = vld [vmem:[#allocation5 + $0x30] sm:$0xff]
    %v223 = vld [vmem:[#allocation5 + $0x38] sm:$0xff]
    %v224 = vld [vmem:[#allocation5 + $0x40] sm:$0xff]
    %v225 = vld [vmem:[#allocation5 + $0x48] sm:$0xff]
    %v226 = vld [vmem:[#allocation5 + $0x50] sm:$0xff]
    %v227 = vld [vmem:[#allocation5 + $0x58] sm:$0xff]
    %v228 = vld [vmem:[#allocation5 + $0x60] sm:$0xff]
    %v229 = vld [vmem:[#allocation5 + $0x68] sm:$0xff]
    %v230 = vld [vmem:[#allocation5 + $0x70] sm:$0xff]
    %v231 = vld [vmem:[#allocation5 + $0x78] sm:$0xff]
    %vm240 = vcmask 1041409
    %v241 = vsel %vm240, %v209, %v208
    %vm242 = vcmask 1042434
    %v243 = vsel %vm242, %v210, %v241
    %vm244 = vcmask 1043459
    %v245 = vsel %vm244, %v211, %v243
    %vm246 = vcmask 1044484
    %v247 = vsel %vm246, %v212, %v245
    %vm248 = vcmask 1045509
    %v249 = vsel %vm248, %v213, %v247
    %vm250 = vcmask 1046534
    %v251 = vsel %vm250, %v214, %v249
    %vm252 = vcmask 1047559
    %v253 = vsel %vm252, %v215, %v251
    %255 = vmatprep.subr.mxu0 0.0
    %256 = vmatpush1.msra.mxu0 %v216
    %257 = vmatprep.subr.mxu0 0.0
    %258 = vmatpush1.msra.mxu0 %v217
    %259 = vmatprep.subr.mxu0 0.0
    %260 = vmatpush1.msra.mxu0 %v218
    %261 = vmatprep.subr.mxu0 0.0
    %262 = vmatpush1.msra.mxu0 %v219
    %263 = vmatprep.subr.mxu0 0.0
    %264 = vmatpush1.msra.mxu0 %v220
    %265 = vmatprep.subr.mxu0 0.0
    %266 = vmatpush1.msra.mxu0 %v221
    %267 = vmatprep.subr.mxu0 0.0
    %268 = vmatpush1.msra.mxu0 %v222
    %269 = vmatprep.subr.mxu0 0.0
    %270 = vmatpush1.msra.mxu0 %v223
    %271 = vmatprep.subr.mxu0 0.0
    %272 = vmatpush1.msra.mxu0 %v224
    %273 = vmatprep.subr.mxu0 0.0
    %274 = vmatpush1.msra.mxu0 %v225
    %275 = vmatprep.subr.mxu0 0.0
    %276 = vmatpush1.msra.mxu0 %v226
    %277 = vmatprep.subr.mxu0 0.0
    %278 = vmatpush1.msra.mxu0 %v227
    %279 = vmatprep.subr.mxu0 0.0
    %280 = vmatpush1.msra.mxu0 %v228
    %281 = vmatprep.subr.mxu0 0.0
    %282 = vmatpush1.msra.mxu0 %v229
    %283 = vmatprep.subr.mxu0 0.0
    %284 = vmatpush1.msra.mxu0 %v230
    %285 = vmatprep.subr.mxu0 0.0
    %286 = vmatpush1.msra.mxu0 %v231
    %287 = vmatprep.subr.mxu0 0.0
    %288 = vmatpush1.msra.mxu0 0.0
    %289 = vmatprep.subr.mxu0 0.0
    %290 = vmatpush1.msra.mxu0 0.0
    %291 = vmatprep.subr.mxu0 0.0
    %292 = vmatpush1.msra.mxu0 0.0
    %293 = vmatprep.subr.mxu0 0.0
    %294 = vmatpush1.msra.mxu0 0.0
    %295 = vmatprep.subr.mxu0 0.0
    %296 = vmatpush1.msra.mxu0 0.0
    %297 = vmatprep.subr.mxu0 0.0
    %298 = vmatpush1.msra.mxu0 0.0
    %299 = vmatprep.subr.mxu0 0.0
    %300 = vmatpush1.msra.mxu0 0.0
    %301 = vmatprep.subr.mxu0 0.0
    %302 = vmatpush1.msra.mxu0 0.0
    %303 = vmatprep.subr.mxu0 0.0
    %304 = vmatpush1.msra.mxu0 0.0
    %305 = vmatprep.subr.mxu0 0.0
    %306 = vmatpush1.msra.mxu0 0.0
    %307 = vmatprep.subr.mxu0 0.0
    %308 = vmatpush1.msra.mxu0 0.0
    %309 = vmatprep.subr.mxu0 0.0
    %310 = vmatpush1.msra.mxu0 0.0
    %311 = vmatprep.subr.mxu0 0.0
    %312 = vmatpush1.msra.mxu0 0.0
    %313 = vmatprep.subr.mxu0 0.0
    %314 = vmatpush1.msra.mxu0 0.0
    %315 = vmatprep.subr.mxu0 0.0
    %316 = vmatpush1.msra.mxu0 0.0
    %317 = vmatprep.subr.mxu0 0.0
    %318 = vmatpush1.msra.mxu0 0.0
    %319 = vmatprep.mubr.f32.mxu0 0.0
    %320 = vmatmul.mubr.f32.gmra.mrb[0].mxu0 %v253
    %v321 = vpop.f32.mrb[0].mxu0
    %v322 = vadd.f32 0.0, %v321
    %v323 = vpop.f32.mrb[0].mxu0
    %324 = vdwg.mxu0
    %v325 = vld [vmem:[#allocation7] sm:$0xff]
    %v326 = vld [vmem:[#allocation7 + $0x8] sm:$0xff]
    %v327 = vld [vmem:[#allocation7 + $0x10] sm:$0xff]
    %v328 = vld [vmem:[#allocation7 + $0x18] sm:$0xff]
    %v329 = vld [vmem:[#allocation7 + $0x20] sm:$0xff]
    %v330 = vld [vmem:[#allocation7 + $0x28] sm:$0xff]
    %v331 = vld [vmem:[#allocation7 + $0x30] sm:$0xff]
    %v332 = vld [vmem:[#allocation7 + $0x38] sm:$0xff]
    %v333 = vld [vmem:[#allocation7 + $0x40] sm:$0xff]
    %v334 = vld [vmem:[#allocation7 + $0x48] sm:$0xff]
    %v335 = vld [vmem:[#allocation7 + $0x50] sm:$0xff]
    %v336 = vld [vmem:[#allocation7 + $0x58] sm:$0xff]
    %v337 = vld [vmem:[#allocation7 + $0x60] sm:$0xff]
    %v338 = vld [vmem:[#allocation7 + $0x68] sm:$0xff]
    %v339 = vld [vmem:[#allocation7 + $0x70] sm:$0xff]
    %v340 = vld [vmem:[#allocation7 + $0x78] sm:$0xff]
    %v341 = vld [vmem:[%s3] sm:$0x1]
    %v343 = vlaneseq
    %v344 = vshrl.u32 %v343, 7
    %v345 = vsub.s32 0, %v344
    %v346 = vrot.slane %v341, %v345
    %348 = vmatprep.subr.mxu0 0.0
    %349 = vmatpush1.msra.mxu0 %v325
    %350 = vmatprep.subr.mxu0 0.0
    %351 = vmatpush1.msra.mxu0 %v326
    %352 = vmatprep.subr.mxu0 0.0
    %353 = vmatpush1.msra.mxu0 %v327
    %354 = vmatprep.subr.mxu0 0.0
    %355 = vmatpush1.msra.mxu0 %v328
    %356 = vmatprep.subr.mxu0 0.0
    %357 = vmatpush1.msra.mxu0 %v329
    %358 = vmatprep.subr.mxu0 0.0
    %359 = vmatpush1.msra.mxu0 %v330
    %360 = vmatprep.subr.mxu0 0.0
    %361 = vmatpush1.msra.mxu0 %v331
    %362 = vmatprep.subr.mxu0 0.0
    %363 = vmatpush1.msra.mxu0 %v332
    %364 = vmatprep.subr.mxu0 0.0
    %365 = vmatpush1.msra.mxu0 %v333
    %366 = vmatprep.subr.mxu0 0.0
    %367 = vmatpush1.msra.mxu0 %v334
    %368 = vmatprep.subr.mxu0 0.0
    %369 = vmatpush1.msra.mxu0 %v335
    %370 = vmatprep.subr.mxu0 0.0
    %371 = vmatpush1.msra.mxu0 %v336
    %372 = vmatprep.subr.mxu0 0.0
    %373 = vmatpush1.msra.mxu0 %v337
    %374 = vmatprep.subr.mxu0 0.0
    %375 = vmatpush1.msra.mxu0 %v338
    %376 = vmatprep.subr.mxu0 0.0
    %377 = vmatpush1.msra.mxu0 %v339
    %378 = vmatprep.subr.mxu0 0.0
    %379 = vmatpush1.msra.mxu0 %v340
    %380 = vmatprep.subr.mxu0 0.0
    %381 = vmatpush1.msra.mxu0 0.0
    %382 = vmatprep.subr.mxu0 0.0
    %383 = vmatpush1.msra.mxu0 0.0
    %384 = vmatprep.subr.mxu0 0.0
    %385 = vmatpush1.msra.mxu0 0.0
    %386 = vmatprep.subr.mxu0 0.0
    %387 = vmatpush1.msra.mxu0 0.0
    %388 = vmatprep.subr.mxu0 0.0
    %389 = vmatpush1.msra.mxu0 0.0
    %390 = vmatprep.subr.mxu0 0.0
    %391 = vmatpush1.msra.mxu0 0.0
    %392 = vmatprep.subr.mxu0 0.0
    %393 = vmatpush1.msra.mxu0 0.0
    %394 = vmatprep.subr.mxu0 0.0
    %395 = vmatpush1.msra.mxu0 0.0
    %396 = vmatprep.subr.mxu0 0.0
    %397 = vmatpush1.msra.mxu0 0.0
    %398 = vmatprep.subr.mxu0 0.0
    %399 = vmatpush1.msra.mxu0 0.0
    %400 = vmatprep.subr.mxu0 0.0
    %401 = vmatpush1.msra.mxu0 0.0
    %402 = vmatprep.subr.mxu0 0.0
    %403 = vmatpush1.msra.mxu0 0.0
    %404 = vmatprep.subr.mxu0 0.0
    %405 = vmatpush1.msra.mxu0 0.0
    %406 = vmatprep.subr.mxu0 0.0
    %407 = vmatpush1.msra.mxu0 0.0
    %408 = vmatprep.subr.mxu0 0.0
    %409 = vmatpush1.msra.mxu0 0.0
    %410 = vmatprep.subr.mxu0 0.0
    %411 = vmatpush1.msra.mxu0 0.0
    %412 = vmatprep.mubr.f32.mxu0 0.0
    %413 = vmatmul.mubr.f32.gmra.mrb[0].mxu0 %v322
    %v414 = vpop.f32.mrb[0].mxu0
    %v415 = vadd.f32 %v346, %v414
    %v416 = vpop.f32.mrb[0].mxu0
    %417 = vdwg.mxu0
    %v418 = vmax.f32 %v415, 0.0
    %v419 = vld [vmem:[#allocation8] sm:$0xff]
    %v420 = vld [vmem:[#allocation8 + $0x8] sm:$0xff]
    %v421 = vld [vmem:[#allocation8 + $0x10] sm:$0xff]
    %v422 = vld [vmem:[#allocation8 + $0x18] sm:$0xff]
    %v423 = vld [vmem:[#allocation8 + $0x20] sm:$0xff]
    %v424 = vld [vmem:[#allocation8 + $0x28] sm:$0xff]
    %v425 = vld [vmem:[#allocation8 + $0x30] sm:$0xff]
    %v426 = vld [vmem:[#allocation8 + $0x38] sm:$0xff]
    %v427 = vld [vmem:[#allocation8 + $0x40] sm:$0xff]
    %v428 = vld [vmem:[#allocation8 + $0x48] sm:$0xff]
    %v429 = vld [vmem:[#allocation8 + $0x50] sm:$0xff]
    %v430 = vld [vmem:[#allocation8 + $0x58] sm:$0xff]
    %v431 = vld [vmem:[#allocation8 + $0x60] sm:$0xff]
    %v432 = vld [vmem:[#allocation8 + $0x68] sm:$0xff]
    %v433 = vld [vmem:[#allocation8 + $0x70] sm:$0xff]
    %v434 = vld [vmem:[#allocation8 + $0x78] sm:$0xff]
    %v435 = vld [vmem:[%s5] sm:$0x1]
    %v437 = vlaneseq
    %v438 = vshrl.u32 %v437, 7
    %v439 = vsub.s32 0, %v438
    %v440 = vrot.slane %v435, %v439
    %442 = vmatprep.subr.mxu0 0.0
    %443 = vmatpush1.msra.mxu0 %v419
    %444 = vmatprep.subr.mxu0 0.0
    %445 = vmatpush1.msra.mxu0 %v420
    %446 = vmatprep.subr.mxu0 0.0
    %447 = vmatpush1.msra.mxu0 %v421
    %448 = vmatprep.subr.mxu0 0.0
    %449 = vmatpush1.msra.mxu0 %v422
    %450 = vmatprep.subr.mxu0 0.0
    %451 = vmatpush1.msra.mxu0 %v423
    %452 = vmatprep.subr.mxu0 0.0
    %453 = vmatpush1.msra.mxu0 %v424
    %454 = vmatprep.subr.mxu0 0.0
    %455 = vmatpush1.msra.mxu0 %v425
    %456 = vmatprep.subr.mxu0 0.0
    %457 = vmatpush1.msra.mxu0 %v426
    %458 = vmatprep.subr.mxu0 0.0
    %459 = vmatpush1.msra.mxu0 %v427
    %460 = vmatprep.subr.mxu0 0.0
    %461 = vmatpush1.msra.mxu0 %v428
    %462 = vmatprep.subr.mxu0 0.0
    %463 = vmatpush1.msra.mxu0 %v429
    %464 = vmatprep.subr.mxu0 0.0
    %465 = vmatpush1.msra.mxu0 %v430
    %466 = vmatprep.subr.mxu0 0.0
    %467 = vmatpush1.msra.mxu0 %v431
    %468 = vmatprep.subr.mxu0 0.0
    %469 = vmatpush1.msra.mxu0 %v432
    %470 = vmatprep.subr.mxu0 0.0
    %471 = vmatpush1.msra.mxu0 %v433
    %472 = vmatprep.subr.mxu0 0.0
    %473 = vmatpush1.msra.mxu0 %v434
    %474 = vmatprep.subr.mxu0 0.0
    %475 = vmatpush1.msra.mxu0 0.0
    %476 = vmatprep.subr.mxu0 0.0
    %477 = vmatpush1.msra.mxu0 0.0
    %478 = vmatprep.subr.mxu0 0.0
    %479 = vmatpush1.msra.mxu0 0.0
    %480 = vmatprep.subr.mxu0 0.0
    %481 = vmatpush1.msra.mxu0 0.0
    %482 = vmatprep.subr.mxu0 0.0
    %483 = vmatpush1.msra.mxu0 0.0
    %484 = vmatprep.subr.mxu0 0.0
    %485 = vmatpush1.msra.mxu0 0.0
    %486 = vmatprep.subr.mxu0 0.0
    %487 = vmatpush1.msra.mxu0 0.0
    %488 = vmatprep.subr.mxu0 0.0
    %489 = vmatpush1.msra.mxu0 0.0
    %490 = vmatprep.subr.mxu0 0.0
    %491 = vmatpush1.msra.mxu0 0.0
    %492 = vmatprep.subr.mxu0 0.0
    %493 = vmatpush1.msra.mxu0 0.0
    %494 = vmatprep.subr.mxu0 0.0
    %495 = vmatpush1.msra.mxu0 0.0
    %496 = vmatprep.subr.mxu0 0.0
    %497 = vmatpush1.msra.mxu0 0.0
    %498 = vmatprep.subr.mxu0 0.0
    %499 = vmatpush1.msra.mxu0 0.0
    %500 = vmatprep.subr.mxu0 0.0
    %501 = vmatpush1.msra.mxu0 0.0
    %502 = vmatprep.subr.mxu0 0.0
    %503 = vmatpush1.msra.mxu0 0.0
    %504 = vmatprep.subr.mxu0 0.0
    %505 = vmatpush1.msra.mxu0 0.0
    %506 = vmatprep.mubr.f32.mxu0 0.0
    %507 = vmatmul.mubr.f32.gmra.mrb[0].mxu0 %v418
    %v508 = vpop.f32.mrb[0].mxu0
    %v509 = vadd.f32 %v440, %v508
    %v510 = vpop.f32.mrb[0].mxu0
    %511 = vdwg.mxu0
    %512 = vst [vmem:[#allocation10] sm:$0xff] %v509
    // Predicated region
    $region42: #{tpu_custom_call.1} parent=1 // pred_check
      _
    $region43: #{tpu_custom_call.1} parent=1 // pred_check_branch
      %514 = sbr.rel (0) target = $region45
    $region44: #{tpu_custom_call.1} parent=1 // pred_region
      %s516 = ssub.s32 128, 128
      %517 = vsyncadd [#allocation4], %s516
      %s519 = sshll.u32 [#allocation10], 4
      %s520 = int_to_ptr.vmem [resolvable:$true] %s519
      %522 = dma.vmem_to_hbm [thread:$0]  %s520, 128, %s6, [#allocation4]
    $region45: #{tpu_custom_call.1} parent=1 // pred_fallthru
      _
    // Predicated region
    $region46: #{tpu_custom_call.1} parent=1 // pred_check
      _
    $region47: #{tpu_custom_call.1} parent=1 // pred_check_branch
      %524 = sbr.rel (0) target = $region49
    $region48: #{tpu_custom_call.1} parent=1 // pred_region
      %525 = dma.done [#allocation4], 128
    $region49: #{tpu_custom_call.1} parent=1 // pred_fallthru
      _
    %526 = vsyncpa [#allocation3], 1
    %527 = vsyncpa [#allocation6], 1
    %528 = vsyncpa [#allocation9], 1
    %529 = vsyncpa [#allocation4], 1

</llo_original>
